<compile_context>
chip_gen: v7x
topology: tpu7x:2x2x1
jax: 0.10.0
libtpu: 0.0.40
codegen_flags: <defaults>
</compile_context>

<pallas_src>
import jax
import jax.numpy as jnp
from jax.experimental import pallas as pl
from jax.experimental.pallas import tpu as pltpu


def _round_up(x, m):
    return (x + m - 1) // m * m


def _linear_kernel(x_ref, w_ref, b_ref, o_ref):
    # x_ref: [TM, in_dim], w_ref: [in_dim, out_dim] (resident), b_ref: [1, out_dim]
    acc = jnp.dot(x_ref[...], w_ref[...], preferred_element_type=jnp.float32)
    o_ref[...] = (acc + b_ref[...]).astype(o_ref.dtype)


def _pick_tile(n8, tm_max):
    """Pick node tile TM (multiple of 8, <= tm_max).

    Prefer the largest TM that exactly divides n8 (zero padding waste); if no
    reasonable divisor exists, fall back to TM<=256 with bounded (<TM) padding.
    Returns (tm, n_pad).
    """
    tm_max = max(8, (tm_max // 8) * 8)
    lo = min(128, tm_max)
    for cand in range(tm_max, lo - 1, -8):
        if n8 % cand == 0:
            return cand, n8
    tm = min(256, tm_max)
    return tm, _round_up(n8, tm)


@jax.jit
def _no_gcn_impl(features, weight, bias):
    n, in_dim = features.shape
    out_dim = weight.shape[0]
    itemsize = features.dtype.itemsize

    # Only the node axis gets padded; minor dims stay at their true size.
    n8 = _round_up(n, 8)

    # VMEM accounting (conservative): tiles are lane-padded inside VMEM, every
    # input is double-buffered by default, and the resident W^T / bias count
    # twice. Budget kept well under v7x's 64 MiB per-TC VMEM.
    k_vmem = _round_up(in_dim, 128)
    f_vmem = _round_up(out_dim, 128)
    resident = 2 * (k_vmem * f_vmem + f_vmem) * itemsize
    per_row = (k_vmem + f_vmem) * itemsize          # x-tile row + out-tile row
    budget = 48 * (1 << 20)
    if budget > resident:
        tm_cap = max(8, ((budget - resident) // (2 * per_row)) // 8 * 8)
    else:
        tm_cap = 8
    # TODO(synk): if in_dim*out_dim ever grows near the VMEM budget, add an F
    # grid axis (tiled W^T block) instead of keeping the weight fully resident.

    tm, n_pad = _pick_tile(n8, min(512, n8, tm_cap))

    # Pad only along N (zeros); transpose weight to [in_dim, out_dim]; 2-D bias.
    if n_pad == n:
        x_p = features
    else:
        x_p = jnp.zeros((n_pad, in_dim), features.dtype).at[:n].set(features)
    w_t = weight.T
    b_2d = bias.reshape(1, out_dim)

    est = 2 * tm * per_row + resident
    vmem_limit = int(min(56 * (1 << 20), max(8 * (1 << 20), 3 * est)))

    out_p = pl.pallas_call(
        _linear_kernel,
        out_shape=jax.ShapeDtypeStruct((n_pad, out_dim), features.dtype),
        grid_spec=pltpu.PrefetchScalarGridSpec(
            num_scalar_prefetch=0,
            grid=(n_pad // tm,),
            in_specs=[
                pl.BlockSpec((tm, in_dim), lambda i: (i, 0)),       # node tiles, true K
                pl.BlockSpec((in_dim, out_dim), lambda i: (0, 0)),  # resident W^T
                pl.BlockSpec((1, out_dim), lambda i: (0, 0)),       # resident bias
            ],
            out_specs=pl.BlockSpec((tm, out_dim), lambda i: (i, 0)),  # true out_dim
        ),
        compiler_params=pltpu.CompilerParams(
            dimension_semantics=("parallel",),
            vmem_limit_bytes=vmem_limit,
        ),
    )(x_p, w_t, b_2d)

    # Strip node padding only (feature dims are already exact).
    return out_p if n_pad == n else out_p[:n]


def no_gcn_forward(g, features, weight, bias):
    """Equivalent of No_GCN.forward(g, features): a single Linear layer.

    g is accepted for signature parity but unused (matching the PyTorch module).
    features: [N, in_dim] float32
    weight:   [out_dim, in_dim] float32  (PyTorch nn.Linear layout)
    bias:     [out_dim]         float32
    """
    del g  # unused, exactly as in the reference module
    return _no_gcn_impl(features, weight, bias)


if __name__ == "__main__":
    # Small shapes consistent with the module: N nodes, in_dim -> out_dim.
    N, IN_DIM, OUT_DIM = 8, 32, 16

    key = jax.random.PRNGKey(0)
    k_x, k_w, k_b = jax.random.split(key, 3)

    features = jax.random.normal(k_x, (N, IN_DIM), dtype=jnp.float32)

    # Deterministic parameter init mimicking nn.Linear's uniform(-1/sqrt(fan_in), +)
    bound = 1.0 / (IN_DIM ** 0.5)
    weight = jax.random.uniform(k_w, (OUT_DIM, IN_DIM), jnp.float32, -bound, bound)
    bias = jax.random.uniform(k_b, (OUT_DIM,), jnp.float32, -bound, bound)

    g = None  # graph is unused by No_GCN.forward

    out = no_gcn_forward(g, features, weight, bias)
    out = jax.block_until_ready(out)

    # Reference check against plain JAX linear.
    ref = features @ weight.T + bias
    assert out.shape == (N, OUT_DIM)
    assert jnp.allclose(out, ref, atol=1e-5, rtol=1e-5)

    # Larger, non-multiple-of-tile node count to verify tiling / N padding.
    N2 = 1500
    feats2 = jax.random.normal(jax.random.PRNGKey(1), (N2, IN_DIM), dtype=jnp.float32)
    out2 = jax.block_until_ready(no_gcn_forward(g, feats2, weight, bias))
    ref2 = feats2 @ weight.T + bias
    assert out2.shape == (N2, OUT_DIM)
    assert jnp.allclose(out2, ref2, atol=1e-5, rtol=1e-5)

    print("KERNEL_OK")
</pallas_src>

<mosaic_0001>
module attributes {stable_mosaic.version = 11 : i64} {
  func.func @_linear_kernel(%arg0: i32, %arg1: memref<8x32xf32, #tpu.memory_space<vmem>>, %arg2: memref<32x16xf32, #tpu.memory_space<vmem>>, %arg3: memref<1x16xf32, #tpu.memory_space<vmem>>, %arg4: memref<8x16xf32, #tpu.memory_space<vmem>>) attributes {dimension_semantics = [#tpu.dimension_semantics<parallel>], iteration_bounds = array<i64: 1>, scalar_prefetch = 0 : i64, scratch_operands = 0 : i64, tpu.core_type = #tpu.core_type<tc>, window_params = [{transform_indices = @transform_0, window_bounds = array<i64: 8, 32>}, {pipeline_mode = #tpu.pipeline_mode<synchronous>, transform_indices = @transform_1, window_bounds = array<i64: 32, 16>}, {pipeline_mode = #tpu.pipeline_mode<synchronous>, transform_indices = @transform_2, window_bounds = array<i64: 1, 16>}, {transform_indices = @transform_3, window_bounds = array<i64: 8, 16>}]} {
    %c0 = arith.constant 0 : index
    %c0_0 = arith.constant 0 : index
    %0 = vector.load %arg1[%c0, %c0_0] : memref<8x32xf32, #tpu.memory_space<vmem>>, vector<8x32xf32>
    %c0_1 = arith.constant 0 : index
    %c0_2 = arith.constant 0 : index
    %1 = vector.load %arg2[%c0_1, %c0_2] : memref<32x16xf32, #tpu.memory_space<vmem>>, vector<32x16xf32>
    %cst = arith.constant dense<0.000000e+00> : vector<8x16xf32>
    %2 = tpu.matmul %0, %1, %cst {dimension_numbers = #tpu.dot_dimension_numbers<[1], [0], [0], [1], [0, 0, 1, 1], [], []>} : vector<8x32xf32>, vector<32x16xf32>, vector<8x16xf32> -> vector<8x16xf32>
    %c0_3 = arith.constant 0 : index
    %c0_4 = arith.constant 0 : index
    %3 = vector.load %arg3[%c0_3, %c0_4] : memref<1x16xf32, #tpu.memory_space<vmem>>, vector<1x16xf32>
    %4 = vector.broadcast %3 : vector<1x16xf32> to vector<8x16xf32>
    %5 = arith.addf %2, %4 : vector<8x16xf32>
    %c0_5 = arith.constant 0 : index
    %c0_6 = arith.constant 0 : index
    %6 = vector.load %arg4[%c0_5, %c0_6] : memref<8x16xf32, #tpu.memory_space<vmem>>, vector<8x16xf32>
    tpu.vector_store %arg4[%c0_5, %c0_6], %5 {strides = array<i32>} : memref<8x16xf32, #tpu.memory_space<vmem>>, vector<8x16xf32>,
    return
  }
  func.func @transform_0(%arg0: i32) -> (i32, i32) {
    %c0_i32 = arith.constant 0 : i32
    %c0_i32_0 = arith.constant 0 : i32
    return %arg0, %c0_i32 : i32, i32
  }
  func.func @transform_1(%arg0: i32) -> (i32, i32) {
    %c0_i32 = arith.constant 0 : i32
    %c0_i32_0 = arith.constant 0 : i32
    %c0_i32_1 = arith.constant 0 : i32
    return %c0_i32, %c0_i32_0 : i32, i32
  }
  func.func @transform_2(%arg0: i32) -> (i32, i32) {
    %c0_i32 = arith.constant 0 : i32
    %c0_i32_0 = arith.constant 0 : i32
    %c0_i32_1 = arith.constant 0 : i32
    return %c0_i32, %c0_i32_0 : i32, i32
  }
  func.func @transform_3(%arg0: i32) -> (i32, i32) {
    %c0_i32 = arith.constant 0 : i32
    %c0_i32_0 = arith.constant 0 : i32
    return %arg0, %c0_i32 : i32, i32
  }
}

</mosaic_0001>

<llo_original>
// kernel: _no_gcn_impl.1
$region0: #{_no_gcn_impl.1}
  #allocation0 [shape = 'u32[]', space=smem, size = 0x4, offset = 0x4, fixed_abs, tag = 'smem constant byte address 0x4 - core index']
  #allocation1 [shape = 'u32[144,128]{1,0:T(1,128)}', space=vmem, size = 0x12000, scoped, tag = 'internal scratch']
  %s0 = inlined_call_operand.vmem [shape: f32[8,32], index: 0, kind: input, shape index: {}]
  %s1 = inlined_call_operand.vmem [shape: f32[32,16], index: 1, kind: input, shape index: {}]
  %s2 = inlined_call_operand.vmem [shape: f32[1,16], index: 2, kind: input, shape index: {}]
  %s3 = inlined_call_operand.hbm [shape: f32[8,16], index: 3, kind: output, shape index: {}]
  %s4 = sld [smem:[#allocation0]]
  $region22: #{_no_gcn_impl.1} parent=0
    _
  %s6 = ssub.s32 1, %s4
  %s7 = scalar_select 0, %s6, %s4
  $region1: #{_no_gcn_impl.1} parent=0
    #allocation2 [shape = 'u8[4096]{0}', space=vmem, size = 0x1000, scoped, tag = 'output window, operand 0, single buffered']
    #allocation3 [shape = 's32[1]{0}', space=sflag, size = 0x4, scoped, tag = 'scoped memory for _no_gcn_impl.1']
    %8 = vsyncpa [#allocation3], 0
    // Predicated region
    $region2: #{_no_gcn_impl.1} parent=1 // pred_check
      _
    $region3: #{_no_gcn_impl.1} parent=1 // pred_check_branch
      %10 = sbr.rel (0) target = $region5
    $region4: #{_no_gcn_impl.1} parent=1 // pred_region
      _
    $region5: #{_no_gcn_impl.1} parent=1 // pred_fallthru
      _
    // Predicated region
    $region6: #{_no_gcn_impl.1} parent=1 // pred_check
      _
    $region7: #{_no_gcn_impl.1} parent=1 // pred_check_branch
      %12 = sbr.rel (0) target = $region9
    $region8: #{_no_gcn_impl.1} parent=1 // pred_region
      _
    $region9: #{_no_gcn_impl.1} parent=1 // pred_fallthru
      _
    // Predicated region
    $region10: #{_no_gcn_impl.1} parent=1 // pred_check
      _
    $region11: #{_no_gcn_impl.1} parent=1 // pred_check_branch
      %14 = sbr.rel (0) target = $region13
    $region12: #{_no_gcn_impl.1} parent=1 // pred_region
      _
    $region13: #{_no_gcn_impl.1} parent=1 // pred_fallthru
      _
    %v15 = vld [vmem:[%s0] sm:$0xff]
    %v16 = vld [vmem:[%s1] sm:$0xff]
    %v17 = vld [vmem:[%s1 + $0x8] sm:$0xff]
    %v18 = vld [vmem:[%s1 + $0x10] sm:$0xff]
    %v19 = vld [vmem:[%s1 + $0x18] sm:$0xff]
    %v20 = vld [vmem:[%s2] sm:$0x1]
    %v22 = vlaneseq
    %v23 = vshrl.u32 %v22, 7
    %v24 = vsub.s32 0, %v23
    %v25 = vrot.slane %v20, %v24
    %vm27 = vcmask 261120
    %v29 = vsel %vm27, %v15, 0
    %31 = vmatprep.subr.mxu0 0.0
    %32 = vmatpush1.msra.mxu0 %v16
    %33 = vmatprep.subr.mxu0 0.0
    %34 = vmatpush1.msra.mxu0 %v17
    %35 = vmatprep.subr.mxu0 0.0
    %36 = vmatpush1.msra.mxu0 %v18
    %37 = vmatprep.subr.mxu0 0.0
    %38 = vmatpush1.msra.mxu0 %v19
    %39 = vmatprep.subr.mxu0 0.0
    %40 = vmatpush1.msra.mxu0 0.0
    %41 = vmatprep.subr.mxu0 0.0
    %42 = vmatpush1.msra.mxu0 0.0
    %43 = vmatprep.subr.mxu0 0.0
    %44 = vmatpush1.msra.mxu0 0.0
    %45 = vmatprep.subr.mxu0 0.0
    %46 = vmatpush1.msra.mxu0 0.0
    %47 = vmatprep.subr.mxu0 0.0
    %48 = vmatpush1.msra.mxu0 0.0
    %49 = vmatprep.subr.mxu0 0.0
    %50 = vmatpush1.msra.mxu0 0.0
    %51 = vmatprep.subr.mxu0 0.0
    %52 = vmatpush1.msra.mxu0 0.0
    %53 = vmatprep.subr.mxu0 0.0
    %54 = vmatpush1.msra.mxu0 0.0
    %55 = vmatprep.subr.mxu0 0.0
    %56 = vmatpush1.msra.mxu0 0.0
    %57 = vmatprep.subr.mxu0 0.0
    %58 = vmatpush1.msra.mxu0 0.0
    %59 = vmatprep.subr.mxu0 0.0
    %60 = vmatpush1.msra.mxu0 0.0
    %61 = vmatprep.subr.mxu0 0.0
    %62 = vmatpush1.msra.mxu0 0.0
    %63 = vmatprep.subr.mxu0 0.0
    %64 = vmatpush1.msra.mxu0 0.0
    %65 = vmatprep.subr.mxu0 0.0
    %66 = vmatpush1.msra.mxu0 0.0
    %67 = vmatprep.subr.mxu0 0.0
    %68 = vmatpush1.msra.mxu0 0.0
    %69 = vmatprep.subr.mxu0 0.0
    %70 = vmatpush1.msra.mxu0 0.0
    %71 = vmatprep.subr.mxu0 0.0
    %72 = vmatpush1.msra.mxu0 0.0
    %73 = vmatprep.subr.mxu0 0.0
    %74 = vmatpush1.msra.mxu0 0.0
    %75 = vmatprep.subr.mxu0 0.0
    %76 = vmatpush1.msra.mxu0 0.0
    %77 = vmatprep.subr.mxu0 0.0
    %78 = vmatpush1.msra.mxu0 0.0
    %79 = vmatprep.subr.mxu0 0.0
    %80 = vmatpush1.msra.mxu0 0.0
    %81 = vmatprep.subr.mxu0 0.0
    %82 = vmatpush1.msra.mxu0 0.0
    %83 = vmatprep.subr.mxu0 0.0
    %84 = vmatpush1.msra.mxu0 0.0
    %85 = vmatprep.subr.mxu0 0.0
    %86 = vmatpush1.msra.mxu0 0.0
    %87 = vmatprep.subr.mxu0 0.0
    %88 = vmatpush1.msra.mxu0 0.0
    %89 = vmatprep.subr.mxu0 0.0
    %90 = vmatpush1.msra.mxu0 0.0
    %91 = vmatprep.subr.mxu0 0.0
    %92 = vmatpush1.msra.mxu0 0.0
    %93 = vmatprep.subr.mxu0 0.0
    %94 = vmatpush1.msra.mxu0 0.0
    %95 = vmatprep.mubr.f32.mxu0 0.0
    %96 = vmatmul.mubr.f32.gmra.mrb[0].mxu0 %v29
    %v97 = vpop.f32.mrb[0].mxu0
    %v98 = vadd.f32 %v25, %v97
    %v99 = vpop.f32.mrb[0].mxu0
    %100 = vdwg.mxu0
    %vm101 = vcmask 130048
    %102 = vst.msk [vmem:[#allocation2] sm:$0xff] %vm101, %v98
    // Predicated region
    $region14: #{_no_gcn_impl.1} parent=1 // pred_check
      _
    $region15: #{_no_gcn_impl.1} parent=1 // pred_check_branch
      %104 = sbr.rel (0) target = $region17
    $region16: #{_no_gcn_impl.1} parent=1 // pred_region
      %s106 = ssub.s32 128, 128
      %107 = vsyncadd [#allocation3], %s106
      %s109 = sshll.u32 [#allocation2], 4
      %s110 = int_to_ptr.vmem [resolvable:$true] %s109
      %112 = dma.vmem_to_hbm [thread:$0]  %s110, 128, %s3, [#allocation3]
    $region17: #{_no_gcn_impl.1} parent=1 // pred_fallthru
      _
    // Predicated region
    $region18: #{_no_gcn_impl.1} parent=1 // pred_check
      _
    $region19: #{_no_gcn_impl.1} parent=1 // pred_check_branch
      %114 = sbr.rel (0) target = $region21
    $region20: #{_no_gcn_impl.1} parent=1 // pred_region
      %115 = dma.done [#allocation3], 128
    $region21: #{_no_gcn_impl.1} parent=1 // pred_fallthru
      _
    %116 = vsyncpa [#allocation3], 1

</llo_original>
